<compile_context>
chip_gen: v7x
topology: tpu7x:2x2x1
jax: 0.10.0
libtpu: 0.0.40
codegen_flags: <defaults>
</compile_context>

<pallas_src>
import functools
import numpy as np
import jax
import jax.numpy as jnp
from jax.experimental import pallas as pl
from jax.experimental.pallas import tpu as pltpu


# ----------------------------------------------------------------------------
# Kernel:  out[B, N] = h_row[B, D] @ W1[D, N] + gist[B, H] @ W2[H, N] + b[1, N]
#
# Grid = (ncol, nk1 + nk2):
#   axis 0 ("parallel")  : output-column tiles (tn = N // ncol); ncol == 2 only
#                          on v7x so each TensorCore streams half the weights.
#   axis 1 ("arbitrary") : reduction.  First nk1 steps stream full-width
#                          (tk1, tn) slabs of W1, remaining nk2 stream W2.
# ----------------------------------------------------------------------------
def _merge_kernel(h_ref, g_ref, w1_ref, w2_ref, b_ref, out_ref, acc_ref, *,
                  nk1):
    k = pl.program_id(1)

    @pl.when(k == 0)
    def _():
        acc_ref[...] = jnp.zeros_like(acc_ref)

    @pl.when(k < nk1)                      # phase 1: h_row @ W1
    def _():
        acc_ref[...] += jnp.dot(h_ref[...], w1_ref[...],
                                preferred_element_type=jnp.float32)

    @pl.when(k >= nk1)                     # phase 2: gist @ W2
    def _():
        acc_ref[...] += jnp.dot(g_ref[...], w2_ref[...],
                                preferred_element_type=jnp.float32)

    @pl.when(k == pl.num_programs(1) - 1)
    def _():
        out_ref[...] = (acc_ref[...] + b_ref[...]).astype(out_ref.dtype)


def _pick_k_tile(dim, max_tile):
    """Largest 128-aligned tile <= max_tile that evenly divides dim.

    Falls back to the full extent for non-128-aligned (demo) dims and never
    returns a degenerate 0-sized tile.
    """
    if dim % 128 != 0 or dim <= 128:
        return dim
    t = min(max_tile, dim)
    t = max((t // 128) * 128, 128)
    while dim % t != 0:
        t -= 128
    return t


def _default_col_splits():
    # Two TensorCores per chip only on v7x; elsewhere a column split just adds
    # grid steps and strides the weight DMAs.
    try:
        if "v7" in jax.devices()[0].device_kind.lower():
            return 2
    except Exception:
        pass
    return 1


def _merge_rows_pallas(h_row, gist, w1, w2, b, out_dtype, *,
                       max_weight_buffer_bytes=8 << 20, num_col_splits=None):
    """Memory-bound fat-GEMV:  out = h_row @ w1 + gist @ w2 + b."""
    B, D = h_row.shape
    Bg, H = gist.shape
    Dw, N = w1.shape
    Hw, Nw = w2.shape
    assert B == Bg and D == Dw and H == Hw and N == Nw and b.shape == (1, N)

    if num_col_splits is None:
        num_col_splits = _default_col_splits()
    ncol = num_col_splits if (num_col_splits > 1
                              and N % (128 * num_col_splits) == 0) else 1
    # TODO(synk): when ncol > 1, pre-block the weights to [ncol, K, N//ncol] at
    # prepare time so each core's half stays fully contiguous in HBM.
    tn = N // ncol

    w_itemsize = jnp.dtype(w1.dtype).itemsize
    max_tk = max(128,
                 (max_weight_buffer_bytes // max(tn * w_itemsize, 1))
                 // 128 * 128)
    tk1 = _pick_k_tile(D, max_tk)
    tk2 = _pick_k_tile(H, max_tk)
    nk1, nk2 = D // tk1, H // tk2
    nk = nk1 + nk2

    x_itemsize = jnp.dtype(h_row.dtype).itemsize
    out_itemsize = jnp.dtype(out_dtype).itemsize
    # Double-buffered weight slabs dominate; everything else is row-sized.
    vmem_needed = (2 * (tk1 + tk2) * tn * w_itemsize
                   + 2 * B * (tk1 + tk2) * x_itemsize
                   + 2 * tn * 4                       # fused bias
                   + 2 * B * tn * out_itemsize        # output block
                   + B * tn * 4)                      # f32 accumulator
    vmem_limit = int(min(max(vmem_needed + (8 << 20), 32 << 20), 64 << 20))

    cost = pl.CostEstimate(
        flops=2 * B * (D + H) * N,
        transcendentals=0,
        bytes_accessed=(w1.size * w_itemsize + w2.size * w_itemsize
                        + (h_row.size + gist.size) * x_itemsize
                        + b.size * 4 + B * N * out_itemsize),
    )

    kernel = functools.partial(_merge_kernel, nk1=nk1)

    return pl.pallas_call(
        kernel,
        out_shape=jax.ShapeDtypeStruct((B, N), out_dtype),
        grid_spec=pltpu.PrefetchScalarGridSpec(
            num_scalar_prefetch=0,
            grid=(ncol, nk),
            in_specs=[
                # Activations: tiny (B, tk) slabs, one per active reduction
                # step; clamped index -> no DMA while the other phase runs.
                pl.BlockSpec((B, tk1),
                             lambda n, k: (0, jnp.minimum(k, nk1 - 1))),
                pl.BlockSpec((B, tk2),
                             lambda n, k: (0, jnp.maximum(k - nk1, 0))),
                # Weights: full-output-width contiguous slabs streamed once.
                pl.BlockSpec((tk1, tn),
                             lambda n, k: (jnp.minimum(k, nk1 - 1), n)),
                pl.BlockSpec((tk2, tn),
                             lambda n, k: (jnp.maximum(k - nk1, 0), n)),
                pl.BlockSpec((1, tn), lambda n, k: (0, n)),   # fused bias
            ],
            out_specs=pl.BlockSpec((B, tn), lambda n, k: (0, n)),
            scratch_shapes=[pltpu.VMEM((B, tn), jnp.float32)],
        ),
        compiler_params=pltpu.CompilerParams(
            dimension_semantics=("parallel", "arbitrary"),
            vmem_limit_bytes=vmem_limit),
        cost_estimate=cost,
    )(h_row, gist, w1, w2, b)


# ----------------------------------------------------------------------------
# One-time param preparation (algebraic fusion + cast) at load time:
#   merge_proj(cat(h, expand(g)))
#     = h @ Wm[:, :D]^T + g @ (We^T @ Wm[:, D:]^T) + (be @ Wm[:, D:]^T + bm)
# eliminating one full [D, D] weight read of HBM traffic per call.
# ----------------------------------------------------------------------------
def prepare_merger_params(params, d_model, weight_dtype=jnp.bfloat16):
    # NOTE: bf16 weights change numerics vs the f32 reference; error grows
    # roughly with sqrt(D) -- re-validate (or use weight_dtype=jnp.float32)
    # at production d_model.
    W_e, b_e = params["W_e"], params["b_e"]          # [D, H], [D]
    W_m, b_m = params["W_m"], params["b_m"]          # [D, 2D], [D]

    Wm1T = W_m[:, :d_model].T                        # [D, D]  acts on h_row
    Wm2T = W_m[:, d_model:].T                        # [D, D]  acts on expand()
    W2 = W_e.T @ Wm2T                                # [H, D]  expand folded in
    b_fused = b_e @ Wm2T + b_m                       # [D]

    return {
        "W1": Wm1T.astype(weight_dtype),
        "W2": W2.astype(weight_dtype),
        "b_fused": b_fused.astype(jnp.float32)[None, :],     # [1, D]
    }


# ----------------------------------------------------------------------------
# Forward (jit with donate_argnums=0 so the row update is in-place).
# ----------------------------------------------------------------------------
def last_hidden_merger(hidden_states, all_last_hidden_state, prompt_input_idsm,
                       idx, prepared):
    """hidden_states: [B, S, D]; all_last_hidden_state: [B, L, T, H]."""
    prompt_index = prompt_input_idsm.shape[-1] - 1
    # TODO(synk): prompt_index is a single shared prompt length per batch, as
    # in the PyTorch reference; ragged per-row prompt lengths are unsupported.
    gist = all_last_hidden_state[:, idx, 0, :]                 # [B, H]
    h_row = hidden_states[:, prompt_index, :]                  # [B, D]

    w1, w2 = prepared["W1"], prepared["W2"]
    merged = _merge_rows_pallas(h_row.astype(w1.dtype),        # cast fuses
                                gist.astype(w2.dtype),         # into gather
                                w1, w2, prepared["b_fused"],
                                out_dtype=hidden_states.dtype)

    # In-place row update (dynamic-update-slice on the donated buffer).
    # TODO(synk): could alias hidden_states into the kernel and scatter the
    # row in-kernel (input_output_aliases + Element-indexed out BlockSpec) to
    # shave a few us of launch latency; kept outside for clarity.
    return hidden_states.at[:, prompt_index, :].set(merged)


last_hidden_merger_jit = jax.jit(last_hidden_merger, static_argnums=(3,),
                                 donate_argnums=(0,))


# ----------------------------------------------------------------------------
# Pure-JAX reference mirroring the PyTorch loop exactly (f32 weights).
# ----------------------------------------------------------------------------
def _reference(hidden_states, all_last_hidden_state, prompt_input_idsm, idx,
               params):
    prompt_index = prompt_input_idsm.shape[-1] - 1
    gist = all_last_hidden_state[:, idx, 0:1, :]               # [B, 1, H]
    out = hidden_states
    for i in range(hidden_states.shape[0]):
        h = hidden_states[i, prompt_index:prompt_index + 1, :]        # [1, D]
        expanded = gist[i] @ params["W_e"].T + params["b_e"]          # [1, D]
        concat = jnp.concatenate([h, expanded], axis=1)               # [1, 2D]
        merged = concat @ params["W_m"].T + params["b_m"]             # [1, D]
        out = out.at[i, prompt_index, :].set(merged[0].astype(out.dtype))
    return out


if __name__ == "__main__":
    # Small config: transformers hidden_size H = 32, mamba d_model D = 32.
    B, S, D = 2, 8, 32          # hidden_states: [B, S, d_model]
    L, T, H = 3, 4, 32          # all_last_hidden_state: [B, L, T, hidden_size]
    P = 5                       # prompt_input_idsm: [B, P] -> prompt_index = 4
    idx = 1

    key = jax.random.PRNGKey(0)
    k1, k2, k3, k4, k5, k6 = jax.random.split(key, 6)

    hidden_states = jax.random.normal(k1, (B, S, D), dtype=jnp.float32)
    all_last_hidden_state = jax.random.normal(k2, (B, L, T, H),
                                              dtype=jnp.float32)
    prompt_input_idsm = jnp.ones((B, P), dtype=jnp.int32)

    # Deterministic parameter init (nn.Linear-style uniform bounds).
    be_bound = 1.0 / np.sqrt(H)
    bm_bound = 1.0 / np.sqrt(2 * D)
    params = {
        "W_e": jax.random.uniform(k3, (D, H), jnp.float32, -be_bound, be_bound),
        "b_e": jax.random.uniform(k4, (D,), jnp.float32, -be_bound, be_bound),
        "W_m": jax.random.uniform(k5, (D, 2 * D), jnp.float32,
                                  -bm_bound, bm_bound),
        "b_m": jax.random.uniform(k6, (D,), jnp.float32, -bm_bound, bm_bound),
    }

    # Reference first (hidden_states is donated to the jitted call below).
    ref = _reference(hidden_states, all_last_hidden_state, prompt_input_idsm,
                     idx, params)
    ref = jax.block_until_ready(ref)

    # One-time fusion + bf16 cast of the merger weights.
    prepared = prepare_merger_params(params, d_model=D)

    out = last_hidden_merger_jit(hidden_states, all_last_hidden_state,
                                 prompt_input_idsm, idx, prepared)
    out = jax.block_until_ready(out)

    np.testing.assert_allclose(np.asarray(out), np.asarray(ref),
                               rtol=2e-2, atol=2e-2)
    print("KERNEL_OK")
</pallas_src>

<mosaic_0001>
module attributes {stable_mosaic.version = 11 : i64} {
  func.func @_merge_kernel(%arg0: i32, %arg1: i32, %arg2: memref<2x32xbf16, #tpu.memory_space<vmem>>, %arg3: memref<2x32xbf16, #tpu.memory_space<vmem>>, %arg4: memref<32x32xbf16, #tpu.memory_space<vmem>>, %arg5: memref<32x32xbf16, #tpu.memory_space<vmem>>, %arg6: memref<1x32xf32, #tpu.memory_space<vmem>>, %arg7: memref<2x32xf32, #tpu.memory_space<vmem>>, %arg8: memref<2x32xf32, #tpu.memory_space<vmem>>) attributes {dimension_semantics = [#tpu.dimension_semantics<parallel>, #tpu.dimension_semantics<arbitrary>], iteration_bounds = array<i64: 1, 2>, scalar_prefetch = 0 : i64, scratch_operands = 1 : i64, tpu.core_type = #tpu.core_type<tc>, window_params = [{transform_indices = @transform_0, window_bounds = array<i64: 2, 32>}, {transform_indices = @transform_1, window_bounds = array<i64: 2, 32>}, {transform_indices = @transform_2, window_bounds = array<i64: 32, 32>}, {transform_indices = @transform_3, window_bounds = array<i64: 32, 32>}, {transform_indices = @transform_4, window_bounds = array<i64: 1, 32>}, {transform_indices = @transform_5, window_bounds = array<i64: 2, 32>}]} {
    %c0_i32 = arith.constant 0 : i32
    %0 = arith.cmpi eq, %arg1, %c0_i32 : i32
    %1 = arith.extui %0 : i1 to i32
    %c0_i32_0 = arith.constant 0 : i32
    %2 = arith.cmpi ne, %1, %c0_i32_0 : i32
    scf.if %2 {
      %cst = arith.constant 0.000000e+00 : f32
      %12 = vector.broadcast %cst : f32 to vector<2x32xf32>
      %c0 = arith.constant 0 : index
      %c0_6 = arith.constant 0 : index
      %13 = vector.load %arg8[%c0, %c0_6] : memref<2x32xf32, #tpu.memory_space<vmem>>, vector<2x32xf32>
      tpu.vector_store %arg8[%c0, %c0_6], %12 {strides = array<i32>} : memref<2x32xf32, #tpu.memory_space<vmem>>, vector<2x32xf32>,
    } else {
    }
    %c1_i32 = arith.constant 1 : i32
    %3 = arith.cmpi slt, %arg1, %c1_i32 : i32
    %4 = arith.extui %3 : i1 to i32
    %c0_i32_1 = arith.constant 0 : i32
    %5 = arith.cmpi ne, %4, %c0_i32_1 : i32
    scf.if %5 {
      %c0 = arith.constant 0 : index
      %c0_6 = arith.constant 0 : index
      %12 = vector.load %arg8[%c0, %c0_6] : memref<2x32xf32, #tpu.memory_space<vmem>>, vector<2x32xf32>
      %c0_7 = arith.constant 0 : index
      %c0_8 = arith.constant 0 : index
      %13 = vector.load %arg2[%c0_7, %c0_8] : memref<2x32xbf16, #tpu.memory_space<vmem>>, vector<2x32xbf16>
      %c0_9 = arith.constant 0 : index
      %c0_10 = arith.constant 0 : index
      %14 = vector.load %arg4[%c0_9, %c0_10] : memref<32x32xbf16, #tpu.memory_space<vmem>>, vector<32x32xbf16>
      %cst = arith.constant dense<0.000000e+00> : vector<2x32xf32>
      %15 = tpu.matmul %13, %14, %cst {dimension_numbers = #tpu.dot_dimension_numbers<[1], [0], [0], [1], [0, 0, 1, 1], [], []>} : vector<2x32xbf16>, vector<32x32xbf16>, vector<2x32xf32> -> vector<2x32xf32>
      %16 = arith.addf %12, %15 : vector<2x32xf32>
      %c0_11 = arith.constant 0 : index
      %c0_12 = arith.constant 0 : index
      %17 = vector.load %arg8[%c0_11, %c0_12] : memref<2x32xf32, #tpu.memory_space<vmem>>, vector<2x32xf32>
      tpu.vector_store %arg8[%c0_11, %c0_12], %16 {strides = array<i32>} : memref<2x32xf32, #tpu.memory_space<vmem>>, vector<2x32xf32>,
    } else {
    }
    %c1_i32_2 = arith.constant 1 : i32
    %6 = arith.cmpi sge, %arg1, %c1_i32_2 : i32
    %7 = arith.extui %6 : i1 to i32
    %c0_i32_3 = arith.constant 0 : i32
    %8 = arith.cmpi ne, %7, %c0_i32_3 : i32
    scf.if %8 {
      %c0 = arith.constant 0 : index
      %c0_6 = arith.constant 0 : index
      %12 = vector.load %arg8[%c0, %c0_6] : memref<2x32xf32, #tpu.memory_space<vmem>>, vector<2x32xf32>
      %c0_7 = arith.constant 0 : index
      %c0_8 = arith.constant 0 : index
      %13 = vector.load %arg3[%c0_7, %c0_8] : memref<2x32xbf16, #tpu.memory_space<vmem>>, vector<2x32xbf16>
      %c0_9 = arith.constant 0 : index
      %c0_10 = arith.constant 0 : index
      %14 = vector.load %arg5[%c0_9, %c0_10] : memref<32x32xbf16, #tpu.memory_space<vmem>>, vector<32x32xbf16>
      %cst = arith.constant dense<0.000000e+00> : vector<2x32xf32>
      %15 = tpu.matmul %13, %14, %cst {dimension_numbers = #tpu.dot_dimension_numbers<[1], [0], [0], [1], [0, 0, 1, 1], [], []>} : vector<2x32xbf16>, vector<32x32xbf16>, vector<2x32xf32> -> vector<2x32xf32>
      %16 = arith.addf %12, %15 : vector<2x32xf32>
      %c0_11 = arith.constant 0 : index
      %c0_12 = arith.constant 0 : index
      %17 = vector.load %arg8[%c0_11, %c0_12] : memref<2x32xf32, #tpu.memory_space<vmem>>, vector<2x32xf32>
      tpu.vector_store %arg8[%c0_11, %c0_12], %16 {strides = array<i32>} : memref<2x32xf32, #tpu.memory_space<vmem>>, vector<2x32xf32>,
    } else {
    }
    %c1_i32_4 = arith.constant 1 : i32
    %9 = arith.cmpi eq, %arg1, %c1_i32_4 : i32
    %10 = arith.extui %9 : i1 to i32
    %c0_i32_5 = arith.constant 0 : i32
    %11 = arith.cmpi ne, %10, %c0_i32_5 : i32
    scf.if %11 {
      %c0 = arith.constant 0 : index
      %c0_6 = arith.constant 0 : index
      %12 = vector.load %arg8[%c0, %c0_6] : memref<2x32xf32, #tpu.memory_space<vmem>>, vector<2x32xf32>
      %c0_7 = arith.constant 0 : index
      %c0_8 = arith.constant 0 : index
      %13 = vector.load %arg6[%c0_7, %c0_8] : memref<1x32xf32, #tpu.memory_space<vmem>>, vector<1x32xf32>
      %14 = vector.broadcast %13 : vector<1x32xf32> to vector<2x32xf32>
      %15 = arith.addf %12, %14 : vector<2x32xf32>
      %c0_9 = arith.constant 0 : index
      %c0_10 = arith.constant 0 : index
      %16 = vector.load %arg7[%c0_9, %c0_10] : memref<2x32xf32, #tpu.memory_space<vmem>>, vector<2x32xf32>
      tpu.vector_store %arg7[%c0_9, %c0_10], %15 {strides = array<i32>} : memref<2x32xf32, #tpu.memory_space<vmem>>, vector<2x32xf32>,
    } else {
    }
    return
  }
  func.func @transform_0(%arg0: i32, %arg1: i32) -> (i32, i32) {
    %c0_i32 = arith.constant 0 : i32
    %0 = arith.minsi %arg1, %c0_i32 : i32
    %c0_i32_0 = arith.constant 0 : i32
    %c0_i32_1 = arith.constant 0 : i32
    return %c0_i32_0, %0 : i32, i32
  }
  func.func @transform_1(%arg0: i32, %arg1: i32) -> (i32, i32) {
    %c1_i32 = arith.constant 1 : i32
    %0 = arith.subi %arg1, %c1_i32 : i32
    %c0_i32 = arith.constant 0 : i32
    %1 = arith.maxsi %0, %c0_i32 : i32
    %c0_i32_0 = arith.constant 0 : i32
    %c0_i32_1 = arith.constant 0 : i32
    return %c0_i32_0, %1 : i32, i32
  }
  func.func @transform_2(%arg0: i32, %arg1: i32) -> (i32, i32) {
    %c0_i32 = arith.constant 0 : i32
    %0 = arith.minsi %arg1, %c0_i32 : i32
    %c0_i32_0 = arith.constant 0 : i32
    return %0, %arg0 : i32, i32
  }
  func.func @transform_3(%arg0: i32, %arg1: i32) -> (i32, i32) {
    %c1_i32 = arith.constant 1 : i32
    %0 = arith.subi %arg1, %c1_i32 : i32
    %c0_i32 = arith.constant 0 : i32
    %1 = arith.maxsi %0, %c0_i32 : i32
    %c0_i32_0 = arith.constant 0 : i32
    return %1, %arg0 : i32, i32
  }
  func.func @transform_4(%arg0: i32, %arg1: i32) -> (i32, i32) {
    %c0_i32 = arith.constant 0 : i32
    %c0_i32_0 = arith.constant 0 : i32
    return %c0_i32, %arg0 : i32, i32
  }
  func.func @transform_5(%arg0: i32, %arg1: i32) -> (i32, i32) {
    %c0_i32 = arith.constant 0 : i32
    %c0_i32_0 = arith.constant 0 : i32
    return %c0_i32, %arg0 : i32, i32
  }
}

</mosaic_0001>

<llo_original>
// kernel: last_hidden_merger.1
$region0: #{last_hidden_merger.1}
  #allocation0 [shape = 'u32[]', space=smem, size = 0x4, offset = 0x4, fixed_abs, tag = 'smem constant byte address 0x4 - core index']
  #allocation1 [shape = 'u32[144,128]{1,0:T(1,128)}', space=vmem, size = 0x12000, scoped, tag = 'internal scratch']
  #allocation2 [shape = 'f32[2,32]{1,0:T(2,128)}', space=vmem, size = 0x400, scoped, tag = 'scratch operand']
  %s0 = inlined_call_operand.vmem [shape: bf16[2,32], index: 0, kind: input, shape index: {}]
  %s1 = inlined_call_operand.vmem [shape: bf16[2,32], index: 1, kind: input, shape index: {}]
  %s2 = inlined_call_operand.vmem [shape: bf16[32,32], index: 2, kind: input, shape index: {}]
  %s3 = inlined_call_operand.hbm [shape: bf16[32,32], index: 3, kind: input, shape index: {}]
  %s4 = inlined_call_operand.vmem [shape: f32[1,32], index: 4, kind: input, shape index: {}]
  %s5 = inlined_call_operand.vmem [shape: f32[2,32], index: 5, kind: output, shape index: {}]
  %s6 = sld [smem:[#allocation0]]
  $region73: #{last_hidden_merger.1} parent=0
    _
  %s8 = ssub.s32 1, %s6
  %s9 = scalar_select 0, %s8, %s6
  $region1: #{last_hidden_merger.1} parent=0
    #allocation3 [shape = 'u8[16384]{0}', space=vmem, size = 0x4000, scoped, tag = 'input window, operand 3']
    #allocation4 [shape = 's32[2]{0}', space=sflag, size = 0x8, scoped, tag = 'scoped memory for last_hidden_merger.1']
    %10 = vsyncpa [#allocation4], 0
    %s11 = scalar_lea.sflag [#allocation4], 1
    %12 = vsyncpa %s11, 0
    loop: start=0, step=1, limit=4
    $region2: #{last_hidden_merger.1} parent=1 // loop_pre_header
      _
    $region3: #{last_hidden_merger.1} parent=1 // loop_header
      %s14 = sphi 0, %s18
      %p15 = scmp.ge.s32.totalorder %s14, 4
      %s21 = sphi 0, %s33
      %s22 = sphi 0, %s29
      %s23 = sphi 0, %s21
      %s24 = sphi 0, %s22
      %s25 = sphi 0, %s23
      %s26 = sphi 0, %s24
      %s40 = sphi 0, %s42
      %s43 = sphi 0, %s40
      %s44 = sphi 0, %s43
      %s60 = sphi 0, %s44
      %s72 = sphi 0, %s74
      %s75 = sphi 0, %s72
      %s76 = sphi 0, %s75
      %s92 = sphi 0, %s76
      %s104 = sphi 0, %s106
      %s107 = sphi 0, %s104
      %s108 = sphi 0, %s107
      %s124 = sphi 0, %s108
      %s138 = sphi 0, %s140
      %s141 = sphi 0, %s138
      %s142 = sphi 0, %s141
      %s158 = sphi 0, %s142
      %s164 = sphi 0, %s166
      %s167 = sphi 0, %s164
      %s168 = sphi 0, %s167
      %s184 = sphi 0, %s168
      %s190 = sphi 0, %s192
      %s193 = sphi 0, %s190
      %s194 = sphi 0, %s193
      %s210 = sphi 0, %s194
    $region4: #{last_hidden_merger.1} parent=1 // loop_header_branch
      %17 = sbr.rel (%p15) target = $region8
    $region5: #{last_hidden_merger.1} parent=1 // loop_body
      %s19 = ssub.s32 %s14, 1
      %s20 = ssub.s32 %s14, 2
      %s27 = sadd.s32 1, %s22
      %p28 = scmp.ge.s32.totalorder %s27, 2
      %s29 = scalar_select %p28, 0, %s27
      %s30 = sadd.s32 1, %s21
      %s31 = scalar_select %p28, %s30, %s21
      %p32 = scmp.ge.s32.totalorder %s31, 1
      %s33 = scalar_select %p32, 0, %s31
      %p34 = scmp.lt.s32.totalorder %s22, 0
      %s35 = scalar_select %p34, %s22, 0
      %p36 = scmp.lt.s32.totalorder %s29, 0
      %s37 = scalar_select %p36, %s29, 0
      %s38 = ssub.s32 %s35, %s37
      %p39 = scmp.eq.s32.totalorder %s38, 0
      %s41 = sadd.s32 %s40, 1
      %s42 = scalar_select %p39, %s40, %s41
      %p45 = pneg %p39
      %p46 = scmp.eq.s32.totalorder %s14, 1
      %p47 = por %p45, %p46
      %p48 = scmp.ne.s32.totalorder %s40, %s43
      %p49 = scmp.eq.s32.totalorder %s14, 0
      %p50 = por %p48, %p49
      %p51 = scmp.ne.s32.totalorder %s40, %s43
      %p52 = scmp.eq.s32.totalorder %s19, 1
      %p53 = por %p51, %p52
      %p54 = scmp.ne.s32.totalorder %s43, %s44
      %p55 = scmp.eq.s32.totalorder %s19, 0
      %p56 = por %p54, %p55
      %p57 = scmp.ne.s32.totalorder %s43, %s44
      %p58 = scmp.eq.s32.totalorder %s20, 1
      %p59 = por %p57, %p58
      %p61 = scmp.ne.s32.totalorder %s44, %s60
      %p62 = scmp.eq.s32.totalorder %s20, 0
      %p63 = por %p61, %p62
      %s64 = ssub.s32 %s22, 1
      %p65 = scmp.gt.s32.totalorder %s64, 0
      %s66 = scalar_select %p65, %s64, 0
      %s67 = ssub.s32 %s29, 1
      %p68 = scmp.gt.s32.totalorder %s67, 0
      %s69 = scalar_select %p68, %s67, 0
      %s70 = ssub.s32 %s66, %s69
      %p71 = scmp.eq.s32.totalorder %s70, 0
      %s73 = sadd.s32 %s72, 1
      %s74 = scalar_select %p71, %s72, %s73
      %p77 = pneg %p71
      %p78 = scmp.eq.s32.totalorder %s14, 1
      %p79 = por %p77, %p78
      %p80 = scmp.ne.s32.totalorder %s72, %s75
      %p81 = scmp.eq.s32.totalorder %s14, 0
      %p82 = por %p80, %p81
      %p83 = scmp.ne.s32.totalorder %s72, %s75
      %p84 = scmp.eq.s32.totalorder %s19, 1
      %p85 = por %p83, %p84
      %p86 = scmp.ne.s32.totalorder %s75, %s76
      %p87 = scmp.eq.s32.totalorder %s19, 0
      %p88 = por %p86, %p87
      %p89 = scmp.ne.s32.totalorder %s75, %s76
      %p90 = scmp.eq.s32.totalorder %s20, 1
      %p91 = por %p89, %p90
      %p93 = scmp.ne.s32.totalorder %s76, %s92
      %p94 = scmp.eq.s32.totalorder %s20, 0
      %p95 = por %p93, %p94
      %p96 = scmp.lt.s32.totalorder %s22, 0
      %s97 = scalar_select %p96, %s22, 0
      %p98 = scmp.lt.s32.totalorder %s29, 0
      %s99 = scalar_select %p98, %s29, 0
      %s100 = ssub.s32 %s97, %s99
      %s101 = ssub.s32 %s21, %s33
      %s102 = sor.u32 %s100, %s101
      %p103 = scmp.eq.s32.totalorder %s102, 0
      %s105 = sadd.s32 %s104, 1
      %s106 = scalar_select %p103, %s104, %s105
      %p109 = pneg %p103
      %p110 = scmp.eq.s32.totalorder %s14, 1
      %p111 = por %p109, %p110
      %p112 = scmp.ne.s32.totalorder %s104, %s107
      %p113 = scmp.eq.s32.totalorder %s14, 0
      %p114 = por %p112, %p113
      %p115 = scmp.ne.s32.totalorder %s104, %s107
      %p116 = scmp.eq.s32.totalorder %s19, 1
      %p117 = por %p115, %p116
      %p118 = scmp.ne.s32.totalorder %s107, %s108
      %p119 = scmp.eq.s32.totalorder %s19, 0
      %p120 = por %p118, %p119
      %p121 = scmp.ne.s32.totalorder %s107, %s108
      %p122 = scmp.eq.s32.totalorder %s20, 1
      %p123 = por %p121, %p122
      %p125 = scmp.ne.s32.totalorder %s108, %s124
      %p126 = scmp.eq.s32.totalorder %s20, 0
      %p127 = por %p125, %p126
      %s128 = ssub.s32 %s22, 1
      %p129 = scmp.gt.s32.totalorder %s128, 0
      %s130 = scalar_select %p129, %s128, 0
      %s131 = ssub.s32 %s29, 1
      %p132 = scmp.gt.s32.totalorder %s131, 0
      %s133 = scalar_select %p132, %s131, 0
      %s134 = ssub.s32 %s130, %s133
      %s135 = ssub.s32 %s21, %s33
      %s136 = sor.u32 %s134, %s135
      %p137 = scmp.eq.s32.totalorder %s136, 0
      %s139 = sadd.s32 %s138, 1
      %s140 = scalar_select %p137, %s138, %s139
      %p143 = pneg %p137
      %p144 = scmp.eq.s32.totalorder %s14, 1
      %p145 = por %p143, %p144
      %p146 = scmp.ne.s32.totalorder %s138, %s141
      %p147 = scmp.eq.s32.totalorder %s14, 0
      %p148 = por %p146, %p147
      %p149 = scmp.ne.s32.totalorder %s138, %s141
      %p150 = scmp.eq.s32.totalorder %s19, 1
      %p151 = por %p149, %p150
      %p152 = scmp.ne.s32.totalorder %s141, %s142
      %p153 = scmp.eq.s32.totalorder %s19, 0
      %p154 = por %p152, %p153
      %p155 = scmp.ne.s32.totalorder %s141, %s142
      %p156 = scmp.eq.s32.totalorder %s20, 1
      %p157 = por %p155, %p156
      %p159 = scmp.ne.s32.totalorder %s142, %s158
      %p160 = scmp.eq.s32.totalorder %s20, 0
      %p161 = por %p159, %p160
      %s162 = ssub.s32 %s21, %s33
      %p163 = scmp.eq.s32.totalorder %s162, 0
      %s165 = sadd.s32 %s164, 1
      %s166 = scalar_select %p163, %s164, %s165
      %p169 = pneg %p163
      %p170 = scmp.eq.s32.totalorder %s14, 1
      %p171 = por %p169, %p170
      %p172 = scmp.ne.s32.totalorder %s164, %s167
      %p173 = scmp.eq.s32.totalorder %s14, 0
      %p174 = por %p172, %p173
      %p175 = scmp.ne.s32.totalorder %s164, %s167
      %p176 = scmp.eq.s32.totalorder %s19, 1
      %p177 = por %p175, %p176
      %p178 = scmp.ne.s32.totalorder %s167, %s168
      %p179 = scmp.eq.s32.totalorder %s19, 0
      %p180 = por %p178, %p179
      %p181 = scmp.ne.s32.totalorder %s167, %s168
      %p182 = scmp.eq.s32.totalorder %s20, 1
      %p183 = por %p181, %p182
      %p185 = scmp.ne.s32.totalorder %s168, %s184
      %p186 = scmp.eq.s32.totalorder %s20, 0
      %p187 = por %p185, %p186
      %s188 = ssub.s32 %s21, %s33
      %p189 = scmp.eq.s32.totalorder %s188, 0
      %s191 = sadd.s32 %s190, 1
      %s192 = scalar_select %p189, %s190, %s191
      %p195 = pneg %p189
      %p196 = scmp.eq.s32.totalorder %s14, 1
      %p197 = por %p195, %p196
      %p198 = scmp.ne.s32.totalorder %s190, %s193
      %p199 = scmp.eq.s32.totalorder %s14, 0
      %p200 = por %p198, %p199
      %p201 = scmp.ne.s32.totalorder %s190, %s193
      %p202 = scmp.eq.s32.totalorder %s19, 1
      %p203 = por %p201, %p202
      %p204 = scmp.ne.s32.totalorder %s193, %s194
      %p205 = scmp.eq.s32.totalorder %s19, 0
      %p206 = por %p204, %p205
      %p207 = scmp.ne.s32.totalorder %s193, %s194
      %p208 = scmp.eq.s32.totalorder %s20, 1
      %p209 = por %p207, %p208
      %p211 = scmp.ne.s32.totalorder %s194, %s210
      %p212 = scmp.eq.s32.totalorder %s20, 0
      %p213 = por %p211, %p212
      %p214 = scmp.le.s32.totalorder 1, %s14
      %p215 = scmp.lt.s32.totalorder %s14, 3
      %p216 = pnand %p214, %p215
      %p217 = pneg %p216
      // Predicated region
      $region9: #{last_hidden_merger.1} parent=5 // pred_check
        _
      $region10: #{last_hidden_merger.1} parent=5 // pred_check_branch
        %219 = sbr.rel (%p216) target = $region12
      $region11: #{last_hidden_merger.1} parent=5 // pred_region
        %s220 = ssub.s32 %s14, 1
        // Predicated region
        $region13: #{last_hidden_merger.1} parent=11 // pred_check
          %p221 = pneg %p180
        $region14: #{last_hidden_merger.1} parent=11 // pred_check_branch
          %223 = sbr.rel (%p221) target = $region16
        $region15: #{last_hidden_merger.1} parent=11 // pred_region
          %p224 = scmp.lt.s32.totalorder %s23, 0
          %s225 = scalar_select %p224, %s23, 0
          %s226 = scalar_lea.vmem %s4, %s225
        $region16: #{last_hidden_merger.1} parent=11 // pred_fallthru
          _
      $region12: #{last_hidden_merger.1} parent=5 // pred_fallthru
        _
      %p227 = scmp.lt.s32.totalorder %s14, 2
      // Predicated region
      $region17: #{last_hidden_merger.1} parent=5 // pred_check
        %p228 = pneg %p227
      $region18: #{last_hidden_merger.1} parent=5 // pred_check_branch
        %230 = sbr.rel (%p228) target = $region20
      $region19: #{last_hidden_merger.1} parent=5 // pred_region
        // Predicated region
        $region21: #{last_hidden_merger.1} parent=19 // pred_check
          %p231 = pneg %p50
        $region22: #{last_hidden_merger.1} parent=19 // pred_check_branch
          %233 = sbr.rel (%p231) target = $region24
        $region23: #{last_hidden_merger.1} parent=19 // pred_region
          %p234 = scmp.lt.s32.totalorder %s22, 0
          %s235 = scalar_select %p234, %s22, 0
          %p236 = scmp.lt.s32.totalorder %s235, 0
          %s237 = scalar_select %p236, %s235, 0
          %s238 = scalar_lea.vmem %s0, %s237
          %p239 = scmp.lt.s32.totalorder %s22, 0
          %s240 = scalar_select %p239, %s22, 0
        $region24: #{last_hidden_merger.1} parent=19 // pred_fallthru
          _
        // Predicated region
        $region25: #{last_hidden_merger.1} parent=19 // pred_check
          %p241 = pneg %p82
        $region26: #{last_hidden_merger.1} parent=19 // pred_check_branch
          %243 = sbr.rel (%p241) target = $region28
        $region27: #{last_hidden_merger.1} parent=19 // pred_region
          %s244 = ssub.s32 %s22, 1
          %p245 = scmp.gt.s32.totalorder %s244, 0
          %s246 = scalar_select %p245, %s244, 0
          %p247 = scmp.lt.s32.totalorder %s246, 0
          %s248 = scalar_select %p247, %s246, 0
          %s249 = scalar_lea.vmem %s1, %s248
          %s250 = ssub.s32 %s22, 1
          %p251 = scmp.gt.s32.totalorder %s250, 0
          %s252 = scalar_select %p251, %s250, 0
        $region28: #{last_hidden_merger.1} parent=19 // pred_fallthru
          _
        // Predicated region
        $region29: #{last_hidden_merger.1} parent=19 // pred_check
          %p253 = pneg %p114
        $region30: #{last_hidden_merger.1} parent=19 // pred_check_branch
          %255 = sbr.rel (%p253) target = $region32
        $region31: #{last_hidden_merger.1} parent=19 // pred_region
          %p256 = scmp.lt.s32.totalorder %s22, 0
          %s257 = scalar_select %p256, %s22, 0
          %s258 = smul.u32 4, %s257
          %p259 = scmp.lt.s32.totalorder %s258, 3
          %s260 = scalar_select %p259, %s258, 3
          %p261 = scmp.lt.s32.totalorder %s21, 0
          %s262 = scalar_select %p261, %s21, 0
          %s263 = sadd.s32 %s262, %s260
          %s264 = smul.addr %s263, 4
          %s265 = scalar_lea.vmem %s2, %s264
          %p266 = scmp.lt.s32.totalorder %s22, 0
          %s267 = scalar_select %p266, %s22, 0
          %s268 = smul.u32 4, %s267
        $region32: #{last_hidden_merger.1} parent=19 // pred_fallthru
          _
        // Predicated region
        $region33: #{last_hidden_merger.1} parent=19 // pred_check
          %p269 = pneg %p148
        $region34: #{last_hidden_merger.1} parent=19 // pred_check_branch
          %271 = sbr.rel (%p269) target = $region36
        $region35: #{last_hidden_merger.1} parent=19 // pred_region
          %s272 = sand.u32 %s138, 1
          %s273 = scalar_lea.sflag [#allocation4], %s272
          %s274 = sand.u32 %s138, 1
          %s275 = smul.addr %s274, 16
          %s276 = scalar_lea.vmem [#allocation3], %s275
          %s277 = ssub.s32 %s22, 1
          %p278 = scmp.gt.s32.totalorder %s277, 0
          %s279 = scalar_select %p278, %s277, 0
          %s280 = smul.u32 4, %s279
          %s282 = ssub.s32 256, 256
          %283 = vsyncadd %s273, %s282
          %s284 = sadd.s32 %s21, %s280
          %s285 = smul.addr %s284, 64
          %s286 = scalar_lea.hbm %s3, %s285
          %s287 = sshll.u32 %s276, 4
          %s288 = int_to_ptr.vmem [resolvable:$true] %s287
          %293 = dma.hbm_to_vmem [thread:$0]  %s286, 256, %s288, %s273, 64, 64, 4
        $region36: #{last_hidden_merger.1} parent=19 // pred_fallthru
          _
      $region20: #{last_hidden_merger.1} parent=5 // pred_fallthru
        _
      %p294 = scmp.le.s32.totalorder 1, %s14
      %p295 = scmp.lt.s32.totalorder %s14, 3
      %p296 = pnand %p294, %p295
      %p297 = pneg %p296
      // Predicated region
      $region37: #{last_hidden_merger.1} parent=5 // pred_check
        _
      $region38: #{last_hidden_merger.1} parent=5 // pred_check_branch
        %299 = sbr.rel (%p296) target = $region40
      $region39: #{last_hidden_merger.1} parent=5 // pred_region
        %s300 = ssub.s32 %s14, 1
        %s301 = sand.u32 %s141, 1
        %s302 = scalar_lea.sflag [#allocation4], %s301
        %s303 = sand.u32 %s141, 1
        %s304 = smul.addr %s303, 16
        %s305 = scalar_lea.vmem [#allocation3], %s304
        // Predicated region
        $region41: #{last_hidden_merger.1} parent=39 // pred_check
          %p306 = pneg %p154
        $region42: #{last_hidden_merger.1} parent=39 // pred_check_branch
          %308 = sbr.rel (%p306) target = $region44
        $region43: #{last_hidden_merger.1} parent=39 // pred_region
          %309 = dma.done %s302, 256
        $region44: #{last_hidden_merger.1} parent=39 // pred_fallthru
          _
        %p310 = scmp.lt.s32.totalorder %s24, 0
        %s311 = scalar_select %p310, %s24, 0
        %p312 = scmp.lt.s32.totalorder %s311, 0
        %s313 = scalar_select %p312, %s311, 0
        %s314 = scalar_lea.vmem %s0, %s313
        %p315 = pneg %p56
        %p316 = pneg %p53
        %s317 = ssub.s32 %s24, 1
        %p318 = scmp.gt.s32.totalorder %s317, 0
        %s319 = scalar_select %p318, %s317, 0
        %p320 = scmp.lt.s32.totalorder %s319, 0
        %s321 = scalar_select %p320, %s319, 0
        %s322 = scalar_lea.vmem %s1, %s321
        %p323 = pneg %p88
        %p324 = pneg %p85
        %p325 = scmp.lt.s32.totalorder %s24, 0
        %s326 = scalar_select %p325, %s24, 0
        %s327 = smul.u32 4, %s326
        %p328 = scmp.lt.s32.totalorder %s327, 3
        %s329 = scalar_select %p328, %s327, 3
        %p330 = scmp.lt.s32.totalorder %s23, 0
        %s331 = scalar_select %p330, %s23, 0
        %s332 = sadd.s32 %s331, %s329
        %s333 = smul.addr %s332, 4
        %s334 = scalar_lea.vmem %s2, %s333
        %p335 = pneg %p120
        %p336 = pneg %p117
        %s337 = sand.u32 %s141, 1
        %s338 = scalar_lea.sflag [#allocation4], %s337
        %s339 = sand.u32 %s141, 1
        %s340 = smul.addr %s339, 16
        %s341 = scalar_lea.vmem [#allocation3], %s340
        %p342 = pneg %p154
        %p343 = pneg %p151
        %p344 = scmp.lt.s32.totalorder %s23, 0
        %s345 = scalar_select %p344, %s23, 0
        %s346 = scalar_lea.vmem %s4, %s345
        %p347 = pneg %p180
        %p348 = pneg %p177
        %p349 = pneg %p206
        %p350 = pneg %p203
        %p351 = scmp.lt.s32.totalorder %s23, 0
        %s352 = scalar_select %p351, %s23, 0
        %s353 = smul.addr %s352, 2
        %s354 = scalar_lea.vmem %s5, %s353
        %p355 = scmp.lt.s32.totalorder %s24, 0
        %s356 = scalar_select %p355, %s24, 0
        %p357 = scmp.lt.s32.totalorder %s356, 0
        %s358 = scalar_select %p357, %s356, 0
        %s359 = scalar_lea.vmem %s0, %s358
        %p360 = scmp.lt.s32.totalorder %s24, 0
        %s361 = scalar_select %p360, %s24, 0
        %s362 = ssub.s32 %s24, 1
        %p363 = scmp.gt.s32.totalorder %s362, 0
        %s364 = scalar_select %p363, %s362, 0
        %p365 = scmp.lt.s32.totalorder %s364, 0
        %s366 = scalar_select %p365, %s364, 0
        %s367 = scalar_lea.vmem %s1, %s366
        %s368 = ssub.s32 %s24, 1
        %p369 = scmp.gt.s32.totalorder %s368, 0
        %s370 = scalar_select %p369, %s368, 0
        %p371 = scmp.lt.s32.totalorder %s24, 0
        %s372 = scalar_select %p371, %s24, 0
        %s373 = smul.u32 4, %s372
        %p374 = scmp.lt.s32.totalorder %s373, 3
        %s375 = scalar_select %p374, %s373, 3
        %p376 = scmp.lt.s32.totalorder %s23, 0
        %s377 = scalar_select %p376, %s23, 0
        %s378 = sadd.s32 %s377, %s375
        %s379 = smul.addr %s378, 4
        %s380 = scalar_lea.vmem %s2, %s379
        %p381 = scmp.lt.s32.totalorder %s24, 0
        %s382 = scalar_select %p381, %s24, 0
        %s383 = smul.u32 4, %s382
        %s384 = ssub.s32 %s24, 1
        %p385 = scmp.gt.s32.totalorder %s384, 0
        %s386 = scalar_select %p385, %s384, 0
        %s387 = smul.u32 4, %s386
        %p388 = scmp.lt.s32.totalorder %s23, 0
        %s389 = scalar_select %p388, %s23, 0
        %s390 = scalar_lea.vmem %s4, %s389
        %p391 = scmp.lt.s32.totalorder %s23, 0
        %s392 = scalar_select %p391, %s23, 0
        %s393 = smul.addr %s392, 2
        %s394 = scalar_lea.vmem %s5, %s393
        %p396 = scmp.eq.s32.totalorder %s24, 0
        // Predicated region
        $region45: #{last_hidden_merger.1} parent=39 // pred_check
          %p397 = pneg %p396
        $region46: #{last_hidden_merger.1} parent=39 // pred_check_branch
          %399 = sbr.rel (%p397) target = $region48
        $region47: #{last_hidden_merger.1} parent=39 // pred_region
          %vm400 = vcmask 254976
          %401 = vst.msk [vmem:[#allocation2] sm:$0x3] %vm400, 0.0
        $region48: #{last_hidden_merger.1} parent=39 // pred_fallthru
          _
        %p402 = scmp.lt.s32.totalorder %s24, 1
        // Predicated region
        $region49: #{last_hidden_merger.1} parent=39 // pred_check
          %p403 = pneg %p402
        $region50: #{last_hidden_merger.1} parent=39 // pred_check_branch
          %405 = sbr.rel (%p403) target = $region52
        $region51: #{last_hidden_merger.1} parent=39 // pred_region
          %v406 = vld [vmem:[#allocation2] sm:$0x3]
          %v407 = vld [vmem:[%s359] sm:$0x1]
          %v408 = vld [vmem:[%s380] sm:$0xf]
          %v409 = vld [vmem:[%s380 + $0x4] sm:$0xf]
          %v410 = vld [vmem:[%s380 + $0x8] sm:$0xf]
          %v411 = vld [vmem:[%s380 + $0xc] sm:$0xf]
          %v416 = vunpack.c.l.b16 %v408
          %v417 = vunpack.c.l.b16 %v409
          %v418 = vunpack.c.l.b16 %v410
          %v419 = vunpack.c.l.b16 %v411
          %v420 = vpack.c.b16 %v417, %v416
          %v421 = vpack.c.b16 %v419, %v418
          %vm424 = vcmask 261120
          %v426 = vsel %vm424, %v407, 0
          %428 = vmatprep.subr.bf16.mxu0 0
          %429 = vmatpush1.bf16.msra.mxu0 %v420
          %430 = vmatprep.subr.bf16.mxu0 0
          %431 = vmatpush1.bf16.msra.mxu0 %v421
          %432 = vmatprep.subr.bf16.mxu0 0
          %433 = vmatpush1.bf16.msra.mxu0 0
          %434 = vmatprep.subr.bf16.mxu0 0
          %435 = vmatpush1.bf16.msra.mxu0 0
          %436 = vmatprep.subr.bf16.mxu0 0
          %437 = vmatpush1.bf16.msra.mxu0 0
          %438 = vmatprep.subr.bf16.mxu0 0
          %439 = vmatpush1.bf16.msra.mxu0 0
          %440 = vmatprep.subr.bf16.mxu0 0
          %441 = vmatpush1.bf16.msra.mxu0 0
          %442 = vmatprep.subr.bf16.mxu0 0
          %443 = vmatpush1.bf16.msra.mxu0 0
          %444 = vmatprep.subr.bf16.mxu0 0
          %445 = vmatpush1.bf16.msra.mxu0 0
          %446 = vmatprep.subr.bf16.mxu0 0
          %447 = vmatpush1.bf16.msra.mxu0 0
          %448 = vmatprep.subr.bf16.mxu0 0
          %449 = vmatpush1.bf16.msra.mxu0 0
          %450 = vmatprep.subr.bf16.mxu0 0
          %451 = vmatpush1.bf16.msra.mxu0 0
          %452 = vmatprep.subr.bf16.mxu0 0
          %453 = vmatpush1.bf16.msra.mxu0 0
          %454 = vmatprep.subr.bf16.mxu0 0
          %455 = vmatpush1.bf16.msra.mxu0 0
          %456 = vmatprep.subr.bf16.mxu0 0
          %457 = vmatpush1.bf16.msra.mxu0 0
          %458 = vmatprep.subr.bf16.mxu0 0
          %459 = vmatpush1.bf16.msra.mxu0 0
          %460 = vmatprep.mubr.bf16.mxu0 0
          %461 = vmatmul.mubr.bf16.gmra.mrb[0].mxu0 %v426
          %v462 = vpop.f32.mrb[0].mxu0
          %v463 = vadd.f32 0.0, %v462
          %v464 = vpop.f32.mrb[0].mxu0
          %v465 = vpop.f32.mrb[0].mxu0
          %v466 = vpop.f32.mrb[0].mxu0
          %467 = vdwg.mxu0
          %v468 = vadd.f32 %v406, %v463
          %vm469 = vcmask 254976
          %470 = vst.msk [vmem:[#allocation2] sm:$0x3] %vm469, %v468
        $region52: #{last_hidden_merger.1} parent=39 // pred_fallthru
          _
        %p471 = scmp.ge.s32.totalorder %s24, 1
        // Predicated region
        $region53: #{last_hidden_merger.1} parent=39 // pred_check
          %p472 = pneg %p471
        $region54: #{last_hidden_merger.1} parent=39 // pred_check_branch
          %474 = sbr.rel (%p472) target = $region56
        $region55: #{last_hidden_merger.1} parent=39 // pred_region
          %v475 = vld [vmem:[#allocation2] sm:$0x3]
          %v476 = vld [vmem:[%s367] sm:$0x1]
          %v477 = vld [vmem:[%s305] sm:$0xf]
          %v478 = vld [vmem:[%s305 + $0x4] sm:$0xf]
          %v479 = vld [vmem:[%s305 + $0x8] sm:$0xf]
          %v480 = vld [vmem:[%s305 + $0xc] sm:$0xf]
          %v485 = vunpack.c.l.b16 %v477
          %v486 = vunpack.c.l.b16 %v478
          %v487 = vunpack.c.l.b16 %v479
          %v488 = vunpack.c.l.b16 %v480
          %v489 = vpack.c.b16 %v486, %v485
          %v490 = vpack.c.b16 %v488, %v487
          %vm493 = vcmask 261120
          %v495 = vsel %vm493, %v476, 0
          %497 = vmatprep.subr.bf16.mxu0 0
          %498 = vmatpush1.bf16.msra.mxu0 %v489
          %499 = vmatprep.subr.bf16.mxu0 0
          %500 = vmatpush1.bf16.msra.mxu0 %v490
          %501 = vmatprep.subr.bf16.mxu0 0
          %502 = vmatpush1.bf16.msra.mxu0 0
          %503 = vmatprep.subr.bf16.mxu0 0
          %504 = vmatpush1.bf16.msra.mxu0 0
          %505 = vmatprep.subr.bf16.mxu0 0
          %506 = vmatpush1.bf16.msra.mxu0 0
          %507 = vmatprep.subr.bf16.mxu0 0
          %508 = vmatpush1.bf16.msra.mxu0 0
          %509 = vmatprep.subr.bf16.mxu0 0
          %510 = vmatpush1.bf16.msra.mxu0 0
          %511 = vmatprep.subr.bf16.mxu0 0
          %512 = vmatpush1.bf16.msra.mxu0 0
          %513 = vmatprep.subr.bf16.mxu0 0
          %514 = vmatpush1.bf16.msra.mxu0 0
          %515 = vmatprep.subr.bf16.mxu0 0
          %516 = vmatpush1.bf16.msra.mxu0 0
          %517 = vmatprep.subr.bf16.mxu0 0
          %518 = vmatpush1.bf16.msra.mxu0 0
          %519 = vmatprep.subr.bf16.mxu0 0
          %520 = vmatpush1.bf16.msra.mxu0 0
          %521 = vmatprep.subr.bf16.mxu0 0
          %522 = vmatpush1.bf16.msra.mxu0 0
          %523 = vmatprep.subr.bf16.mxu0 0
          %524 = vmatpush1.bf16.msra.mxu0 0
          %525 = vmatprep.subr.bf16.mxu0 0
          %526 = vmatpush1.bf16.msra.mxu0 0
          %527 = vmatprep.subr.bf16.mxu0 0
          %528 = vmatpush1.bf16.msra.mxu0 0
          %529 = vmatprep.mubr.bf16.mxu0 0
          %530 = vmatmul.mubr.bf16.gmra.mrb[0].mxu0 %v495
          %v531 = vpop.f32.mrb[0].mxu0
          %v532 = vadd.f32 0.0, %v531
          %v533 = vpop.f32.mrb[0].mxu0
          %v534 = vpop.f32.mrb[0].mxu0
          %v535 = vpop.f32.mrb[0].mxu0
          %536 = vdwg.mxu0
          %v537 = vadd.f32 %v475, %v532
          %vm538 = vcmask 254976
          %539 = vst.msk [vmem:[#allocation2] sm:$0x3] %vm538, %v537
        $region56: #{last_hidden_merger.1} parent=39 // pred_fallthru
          _
        %p540 = scmp.eq.s32.totalorder %s24, 1
        // Predicated region
        $region57: #{last_hidden_merger.1} parent=39 // pred_check
          %p541 = pneg %p540
        $region58: #{last_hidden_merger.1} parent=39 // pred_check_branch
          %543 = sbr.rel (%p541) target = $region60
        $region59: #{last_hidden_merger.1} parent=39 // pred_region
          %v544 = vld [vmem:[#allocation2] sm:$0x3]
          %v545 = vld [vmem:[%s390] sm:$0x1]
          %v547 = vlaneseq
          %v548 = vshrl.u32 %v547, 7
          %v549 = vsub.s32 0, %v548
          %v550 = vrot.slane %v545, %v549
          %v552 = vadd.f32 %v544, %v550
          %vm553 = vcmask 254976
          %554 = vst.msk [vmem:[%s394] sm:$0x3] %vm553, %v552
        $region60: #{last_hidden_merger.1} parent=39 // pred_fallthru
          _
        %p555 = scmp.lt.s32.totalorder %s23, 0
        %s556 = scalar_select %p555, %s23, 0
        %s557 = smul.addr %s556, 2
        %s558 = scalar_lea.vmem %s5, %s557
        // Predicated region
        $region61: #{last_hidden_merger.1} parent=39 // pred_check
          %p559 = pneg %p203
        $region62: #{last_hidden_merger.1} parent=39 // pred_check_branch
          %561 = sbr.rel (%p559) target = $region64
        $region63: #{last_hidden_merger.1} parent=39 // pred_region
          _
        $region64: #{last_hidden_merger.1} parent=39 // pred_fallthru
          _
        // Predicated region
        $region65: #{last_hidden_merger.1} parent=39 // pred_check
          %p562 = pneg %p203
        $region66: #{last_hidden_merger.1} parent=39 // pred_check_branch
          %564 = sbr.rel (%p562) target = $region68
        $region67: #{last_hidden_merger.1} parent=39 // pred_region
          %p565 = scmp.lt.s32.totalorder %s23, 0
          %s566 = scalar_select %p565, %s23, 0
          %s567 = smul.addr %s566, 2
          %s568 = scalar_lea.vmem %s5, %s567
        $region68: #{last_hidden_merger.1} parent=39 // pred_fallthru
          _
      $region40: #{last_hidden_merger.1} parent=5 // pred_fallthru
        _
      %p569 = scmp.le.s32.totalorder 2, %s14
      // Predicated region
      $region69: #{last_hidden_merger.1} parent=5 // pred_check
        %p570 = pneg %p569
      $region70: #{last_hidden_merger.1} parent=5 // pred_check_branch
        %572 = sbr.rel (%p570) target = $region72
      $region71: #{last_hidden_merger.1} parent=5 // pred_region
        %s573 = ssub.s32 %s14, 2
      $region72: #{last_hidden_merger.1} parent=5 // pred_fallthru
        _
    $region6: #{last_hidden_merger.1} parent=1 // loop_footer
      %s18 = sadd.s32 1, %s14
    $region7: #{last_hidden_merger.1} parent=1 // loop_footer_branch
      %13 = sbr.rel target = $region3
    $region8: #{last_hidden_merger.1} parent=1 // loop_exit
      _
    %574 = vsyncpa [#allocation4], 1
    %s575 = scalar_lea.sflag [#allocation4], 1
    %576 = vsyncpa %s575, 1

</llo_original>
